<compile_context>
chip_gen: v5e
topology: v5e:2x2
jax: 0.10.0
libtpu: 0.0.40
codegen_flags: <defaults>
</compile_context>

<pallas_src>
import functools
import itertools
import math

import numpy as np
import jax
import jax.numpy as jnp
from jax.experimental import pallas as pl
from jax.experimental.pallas import tpu as pltpu


def _round_up(x, m):
    return ((x + m - 1) // m) * m


_LOG_EPS = math.log(1e-8)   # reference adds 1e-8 inside the logs; clamp matches its tail


# ---------------------------------------------------------------------------
# Pallas kernel: one row-tile of
#   C = w_line * cdist_L1(out_line, tgt_line) + w_class * (pos - neg)[:, tgt_ids]
# ---------------------------------------------------------------------------
def _cost_kernel(logits_ref, lines_ref, tgt_ids_ref, tgt_lines_t_ref, c_ref,
                 *, alpha, gather_first, w_class, negate_line):
    # logits_ref:      [TILE_N, Kpad]  raw classification logits
    # lines_ref:       [TILE_N, 4]     predicted line coords (pre-scaled by |w_line|)
    # tgt_ids_ref:     [1, Tpad]       padded target class ids (-1 = padding)
    # tgt_lines_t_ref: [8, Tpad]       target line coords^T (pre-scaled by |w_line|)
    # c_ref:           [TILE_N, Tpad]  output cost tile
    k_pad = logits_ref.shape[1]
    t_pad = c_ref.shape[1]

    # one-hot(tgt_ids)^T built in-kernel; VALU-only (iota + cmp + select) and
    # cheap relative to the EUP-bound focal plane.  w_class folded in here for
    # the non-gather-first path.
    ids = tgt_ids_ref[...]                                            # [1, Tpad] int32
    class_iota = jax.lax.broadcasted_iota(jnp.int32, (k_pad, t_pad), 0)
    onehot_scale = 1.0 if gather_first else float(w_class)
    onehot_t = jnp.where(class_iota == ids, onehot_scale, 0.0)        # f32 [Kpad, Tpad]

    def _focal(x, scale):
        # Focal classification cost straight from logits:
        #   p = sigmoid(x); log p = -log(1+e^-x); log(1-p) = -x - log(1+e^-x)
        # 2 heavy EUP ops (exp, log) + 1 approx reciprocal (+2 Newton steps on
        # the VALU) instead of sigmoid + 2 logs.
        xc = jnp.maximum(x, -87.0)                  # keep exp(-x) finite in f32
        e = jnp.exp(-xc)
        lse = jnp.log(1.0 + e)
        log_p = jnp.maximum(-lse, _LOG_EPS)         # ~= log(p + 1e-8)
        log_1mp = jnp.maximum(-xc - lse, _LOG_EPS)  # ~= log(1 - p + 1e-8)
        d = 1.0 + e
        r = pl.reciprocal(d, approx=True)
        r = r * (2.0 - d * r)                       # Newton 1
        p = r * (2.0 - d * r)                       # Newton 2 -> p = sigmoid(x) @ f32
        omp = 1.0 - p
        pos = (alpha * scale) * (omp * omp) * (-log_p)
        neg = ((1.0 - alpha) * scale) * (p * p) * (-log_1mp)
        return pos - neg

    logits = logits_ref[...]
    if gather_first:
        # Few targets, many classes: gather raw logits first.  Force full
        # precision on the MXU since the gathered values feed a nonlinear
        # transform; w_class is folded into the focal constants (no extra
        # full-plane multiply).
        gathered = jnp.dot(logits, onehot_t,
                           preferred_element_type=jnp.float32,
                           precision=jax.lax.Precision.HIGHEST)
        cost_class = _focal(gathered, float(w_class))
    else:
        # Focal transform on [TILE_N, Kpad], then gather as an MXU matmul with
        # w_class pre-folded into the one-hot.
        cost_class = jnp.dot(_focal(logits, 1.0), onehot_t,
                             preferred_element_type=jnp.float32)

    # L1 cdist between predicted and target lines (D == 4, unrolled, pure VALU).
    ol = lines_ref[...]               # [TILE_N, 4]
    tl = tgt_lines_t_ref[...]         # [8, Tpad], rows 0..3 valid
    ol_c = [ol[:, d:d + 1] for d in range(4)]
    tl_r = [tl[d:d + 1, :] for d in range(4)]
    cost_line = jnp.abs(ol_c[0] - tl_r[0])
    for d in range(1, 4):
        cost_line = cost_line + jnp.abs(ol_c[d] - tl_r[d])

    # Weights already folded -> single combine op (subtract handles w_line < 0).
    if negate_line:
        c_ref[...] = cost_class - cost_line
    else:
        c_ref[...] = cost_class + cost_line


# ---------------------------------------------------------------------------
# Generation-aware sizing
# ---------------------------------------------------------------------------
def _chip_info():
    """Returns (vmem_bytes_per_core, tensorcores_per_chip); conservative defaults."""
    vmem = None
    cores = None
    try:
        info = pltpu.get_tpu_info()
        v = getattr(info, "vmem_capacity_bytes", None)
        if isinstance(v, (int, np.integer)) and v > 0:
            vmem = int(v)
        for a in ("num_cores", "num_tensorcores", "tensorcores_per_chip",
                  "core_count"):
            c = getattr(info, a, None)
            if isinstance(c, (int, np.integer)) and c > 0:
                cores = int(c)
                break
    except Exception:
        pass
    kind = ""
    try:
        kind = jax.devices()[0].device_kind.lower()
    except Exception:
        pass
    if vmem is None:
        if ("v4" in kind) or ("v5" in kind) or ("v6" in kind):
            vmem = 128 << 20
        else:
            vmem = 64 << 20        # v7x-sized; also the safe default when unknown
    if cores is None:
        cores = 2 if "v7" in kind else 1
    return int(vmem), int(cores)


def _working_set_bytes(tile, k_pad, t_pad):
    resident = 2 * (1 + 8) * t_pad * 4                              # ids + tgt lines^T (2 bufs)
    streamed = 2 * tile * (k_pad + 4 + t_pad) * 4                   # logits + lines + out (2 bufs)
    temps = (6 * tile * max(k_pad, t_pad) + k_pad * t_pad) * 4      # focal/cdist/one-hot temps
    return resident + streamed + temps


def _pick_tile_n(n, k_pad, t_pad, budget_bytes, tile_cap):
    """Largest row tile (<=tile_cap, multiple of 8) whose working set fits."""
    tile = tile_cap
    while tile > 8 and _working_set_bytes(tile, k_pad, t_pad) > budget_bytes:
        tile //= 2
    tile = max(8, tile)
    return min(tile, _round_up(max(n, 1), 8))


def compute_cost_matrix_padded(pred_logits, pred_lines, tgt_ids, tgt_lines,
                               *, cost_class=1.0, cost_line=1.0,
                               focal_alpha=0.25):
    """Returns the padded cost matrix [n_pad, t_pad] plus (bs, nq, total_t)."""
    bs, nq, num_classes = pred_logits.shape
    total_t = int(tgt_ids.shape[0])
    n = bs * nq

    k_pad = _round_up(num_classes, 128)
    t_pad = _round_up(max(total_t, 1), 128)

    # Per-generation VMEM budget / tile cap and TensorCore count.
    vmem_phys, num_cores = _chip_info()
    vmem_cap = int(min(vmem_phys - (8 << 20), 100 << 20))   # v7x -> 56 MiB, v5e/v6e -> 100 MiB
    tile_cap = 1024 if vmem_phys >= (100 << 20) else 512
    tile_n = _pick_tile_n(n, k_pad, t_pad, vmem_cap, tile_cap)

    # Pad rows so the grid splits evenly across TensorCores when core-parallel.
    row_multiple = tile_n * max(num_cores, 1)
    n_pad = _round_up(n, row_multiple)
    grid = (n_pad // tile_n,)

    gather_first = t_pad < k_pad
    line_scale = abs(float(cost_line))
    negate_line = float(cost_line) < 0.0

    logits = jnp.pad(pred_logits.reshape(n, num_classes).astype(jnp.float32),
                     ((0, n_pad - n), (0, k_pad - num_classes)))
    lines = jnp.pad(pred_lines.reshape(n, 4).astype(jnp.float32) * line_scale,
                    ((0, n_pad - n), (0, 0)))

    # Padded target ids: -1 marks padding (never matches a class -> zero column).
    tgt_ids_row = jnp.full((1, t_pad), -1, jnp.int32).at[0, :total_t].set(
        tgt_ids.astype(jnp.int32))
    tgt_lines_t = jnp.pad((tgt_lines.astype(jnp.float32) * line_scale).T,
                          ((0, 4), (0, t_pad - total_t)))

    kernel = functools.partial(
        _cost_kernel, alpha=float(focal_alpha), gather_first=gather_first,
        w_class=float(cost_class), negate_line=negate_line)

    vmem_limit = int(min(vmem_cap,
                         max(32 << 20,
                             _working_set_bytes(tile_n, k_pad, t_pad) + (2 << 20))))

    cost_est = pl.CostEstimate(
        flops=int(2 * n_pad * k_pad * t_pad + 12 * n_pad * t_pad
                  + 3 * k_pad * t_pad * grid[0]),
        transcendentals=int(3 * n_pad * (t_pad if gather_first else k_pad)),
        bytes_accessed=int(4 * (n_pad * k_pad + n_pad * 4 + t_pad
                                + 8 * t_pad + n_pad * t_pad)))

    def _run(dim_sem):
        out = pl.pallas_call(
            kernel,
            out_shape=jax.ShapeDtypeStruct((n_pad, t_pad), jnp.float32),
            grid_spec=pltpu.PrefetchScalarGridSpec(
                num_scalar_prefetch=0,
                grid=grid,
                in_specs=[
                    pl.BlockSpec((tile_n, k_pad), lambda i: (i, 0)),
                    pl.BlockSpec((tile_n, 4), lambda i: (i, 0)),
                    pl.BlockSpec((1, t_pad), lambda i: (0, 0)),   # resident (tiny)
                    pl.BlockSpec((8, t_pad), lambda i: (0, 0)),   # resident (tiny)
                ],
                out_specs=pl.BlockSpec((tile_n, t_pad), lambda i: (i, 0)),
            ),
            compiler_params=pltpu.CompilerParams(
                dimension_semantics=dim_sem,
                vmem_limit_bytes=vmem_limit),
            cost_estimate=cost_est,
        )(logits, lines, tgt_ids_row, tgt_lines_t)
        return jax.block_until_ready(out)

    if num_cores > 1 and grid[0] % num_cores == 0:
        # v7x: shard row tiles across both TensorCores; fall back safely if the
        # semantic is rejected on this toolchain/chip.
        try:
            c_pad = _run((pltpu.CORE_PARALLEL,))
        except Exception:
            c_pad = _run(("parallel",))
    else:
        c_pad = _run(("parallel",))

    return c_pad, (bs, nq, total_t)


# ---------------------------------------------------------------------------
# Host-side linear sum assignment: Jonker–Volgenant shortest augmenting path
# (same algorithm as scipy.optimize.linear_sum_assignment), pure numpy.
# TODO(synk): the Hungarian assignment has no clean Pallas equivalent; it runs
# on host over the kernel-produced cost matrix.
# ---------------------------------------------------------------------------
def _lsa_core(cost):
    """Solve LSA for cost of shape (n, m) with n <= m; assigns every row."""
    cost = np.asarray(cost, dtype=np.float64)
    n, m = cost.shape
    u = np.zeros(n)
    v = np.zeros(m)
    path = np.full(m, -1, dtype=np.int64)
    col4row = np.full(n, -1, dtype=np.int64)
    row4col = np.full(m, -1, dtype=np.int64)

    for cur_row in range(n):
        shortest = np.full(m, np.inf)
        SR = np.zeros(n, dtype=bool)
        SC = np.zeros(m, dtype=bool)
        min_val = 0.0
        i = cur_row
        sink = -1
        while sink == -1:
            SR[i] = True
            remaining = np.flatnonzero(~SC)
            r = min_val + cost[i, remaining] - u[i] - v[remaining]
            better = r < shortest[remaining]
            upd = remaining[better]
            shortest[upd] = r[better]
            path[upd] = i
            j = remaining[np.argmin(shortest[remaining])]
            min_val = shortest[j]
            if not np.isfinite(min_val):
                raise ValueError("cost matrix is infeasible")
            SC[j] = True
            if row4col[j] == -1:
                sink = j
            else:
                i = row4col[j]
        # update dual variables
        u[cur_row] += min_val
        sr_idx = np.flatnonzero(SR)
        sr_idx = sr_idx[sr_idx != cur_row]
        u[sr_idx] += min_val - shortest[col4row[sr_idx]]
        sc_idx = np.flatnonzero(SC)
        v[sc_idx] -= min_val - shortest[sc_idx]
        # augment
        j = sink
        while True:
            i = path[j]
            row4col[j] = i
            col4row[i], j = j, col4row[i]
            if i == cur_row:
                break
    return np.arange(n, dtype=np.int64), col4row.astype(np.int64)


def _linear_sum_assignment(cost):
    cost = np.asarray(cost, dtype=np.float64)
    if cost.size == 0:
        return (np.empty(0, dtype=np.int64), np.empty(0, dtype=np.int64))
    if cost.shape[0] <= cost.shape[1]:
        return _lsa_core(cost)
    # more rows than cols: solve the transpose, then re-sort by row index
    _, cols_t = _lsa_core(cost.T)           # cols_t[c] = row matched to col c
    order = np.argsort(cols_t)
    return cols_t[order], order.astype(np.int64)


class HungarianMatcher:
    def __init__(self, cost_class=1.0, cost_bbox=1.0, focal_alpha=0.25):
        assert cost_class != 0 or cost_bbox != 0, "all costs cant be 0"
        self.cost_class = cost_class
        self.cost_line = cost_bbox
        self.focal_alpha = focal_alpha

    def __call__(self, outputs, targets):
        tgt_ids = jnp.concatenate([v["labels"] for v in targets])
        tgt_lines = jnp.concatenate([v["lines"] for v in targets])
        c_pad, (bs, nq, total_t) = compute_cost_matrix_padded(
            outputs["pred_logits"], outputs["pred_lines"], tgt_ids, tgt_lines,
            cost_class=self.cost_class, cost_line=self.cost_line,
            focal_alpha=self.focal_alpha)
        n = bs * nq
        # Slice the padded buffer on device before the D2H copy so only the
        # real [n, total_t] cost matrix is transferred to host.
        c_dev = c_pad[:n, :total_t]
        c_np = np.asarray(jax.block_until_ready(c_dev)).reshape(bs, nq, total_t)
        sizes = [int(v["lines"].shape[0]) for v in targets]
        indices, off = [], 0
        for i, sz in enumerate(sizes):
            sub = c_np[i, :, off:off + sz]
            indices.append(_linear_sum_assignment(sub))
            off += sz
        return c_np, indices


# ---------------------------------------------------------------------------
def _reference_cost(pred_logits, pred_lines, tgt_ids, tgt_lines,
                    cost_class=1.0, cost_line=1.0, alpha=0.25):
    bs, nq, _ = pred_logits.shape
    prob = jax.nn.sigmoid(pred_logits.reshape(bs * nq, -1).astype(jnp.float32))
    ol = pred_lines.reshape(bs * nq, 4).astype(jnp.float32)
    neg = (1 - alpha) * prob ** 2.0 * -jnp.log(1 - prob + 1e-8)
    pos = alpha * (1 - prob) ** 2.0 * -jnp.log(prob + 1e-8)
    cc = pos[:, tgt_ids] - neg[:, tgt_ids]
    cl = jnp.sum(jnp.abs(ol[:, None, :] - tgt_lines[None, :, :]), axis=-1)
    return (cost_line * cl + cost_class * cc).reshape(bs, nq, -1)


def _brute_force_min_cost(cost):
    cost = np.asarray(cost, dtype=np.float64)
    nr, nc = cost.shape
    if nr >= nc:
        return min(cost[list(p), list(range(nc))].sum()
                   for p in itertools.permutations(range(nr), nc))
    return min(cost[list(range(nr)), list(p)].sum()
               for p in itertools.permutations(range(nc), nr))


if __name__ == "__main__":
    key = jax.random.PRNGKey(0)
    bs, nq, num_classes = 2, 8, 4
    sizes = [3, 5]

    k1, k2, k3, _ = jax.random.split(key, 4)
    outputs = {
        "pred_logits": jax.random.normal(k1, (bs, nq, num_classes), jnp.float32),
        "pred_lines": jax.random.uniform(k2, (bs, nq, 4), jnp.float32),
    }
    targets = []
    for i, sz in enumerate(sizes):
        kl, kb = jax.random.split(jax.random.fold_in(k3, i))
        targets.append({
            "labels": jax.random.randint(kl, (sz,), 0, num_classes, jnp.int32),
            "lines": jax.random.uniform(kb, (sz, 4), jnp.float32),
        })

    matcher = HungarianMatcher(cost_class=1.0, cost_bbox=1.0, focal_alpha=0.25)
    c, indices = matcher(outputs, targets)

    # correctness check vs. pure-JAX reference
    tgt_ids = jnp.concatenate([v["labels"] for v in targets])
    tgt_lines = jnp.concatenate([v["lines"] for v in targets])
    c_ref = _reference_cost(outputs["pred_logits"], outputs["pred_lines"],
                            tgt_ids, tgt_lines)
    np.testing.assert_allclose(np.asarray(c),
                               np.asarray(jax.block_until_ready(c_ref)),
                               rtol=1e-5, atol=1e-5)

    # validate the Hungarian solver against brute force at these tiny sizes
    off = 0
    for b, ((ri, ci), sz) in enumerate(zip(indices, sizes)):
        assert len(ri) == len(ci) == min(nq, sz)
        sub = np.asarray(c)[b, :, off:off + sz]
        hung_cost = float(sub[ri, ci].sum())
        assert abs(hung_cost - _brute_force_min_cost(sub)) < 1e-6
        off += sz

    print("KERNEL_OK")
</pallas_src>

<mosaic_0001>
module attributes {stable_mosaic.version = 11 : i64} {
  func.func @_cost_kernel(%arg0: i32, %arg1: memref<16x128xf32, #tpu.memory_space<vmem>>, %arg2: memref<16x4xf32, #tpu.memory_space<vmem>>, %arg3: memref<1x128xi32, #tpu.memory_space<vmem>>, %arg4: memref<8x128xf32, #tpu.memory_space<vmem>>, %arg5: memref<16x128xf32, #tpu.memory_space<vmem>>) attributes {dimension_semantics = [#tpu.dimension_semantics<parallel>], iteration_bounds = array<i64: 1>, scalar_prefetch = 0 : i64, scratch_operands = 0 : i64, tpu.core_type = #tpu.core_type<tc>, window_params = [{transform_indices = @transform_0, window_bounds = array<i64: 16, 128>}, {transform_indices = @transform_1, window_bounds = array<i64: 16, 4>}, {pipeline_mode = #tpu.pipeline_mode<synchronous>, transform_indices = @transform_2, window_bounds = array<i64: 1, 128>}, {pipeline_mode = #tpu.pipeline_mode<synchronous>, transform_indices = @transform_3, window_bounds = array<i64: 8, 128>}, {transform_indices = @transform_4, window_bounds = array<i64: 16, 128>}]} {
    %c0 = arith.constant 0 : index
    %c0_0 = arith.constant 0 : index
    %0 = vector.load %arg3[%c0, %c0_0] : memref<1x128xi32, #tpu.memory_space<vmem>>, vector<1x128xi32>
    %1 = tpu.iota {dimensions = array<i32: 0>} : vector<128x128xi32>
    %2 = vector.broadcast %0 : vector<1x128xi32> to vector<128x128xi32>
    %3 = arith.cmpi eq, %1, %2 : vector<128x128xi32>
    %cst = arith.constant 1.000000e+00 : f32
    %cst_1 = arith.constant 0.000000e+00 : f32
    %4 = vector.broadcast %cst : f32 to vector<128x128xf32>
    %5 = vector.broadcast %cst_1 : f32 to vector<128x128xf32>
    %6 = arith.select %3, %4, %5 : vector<128x128xi1>, vector<128x128xf32>
    %c0_2 = arith.constant 0 : index
    %c0_3 = arith.constant 0 : index
    %7 = vector.load %arg1[%c0_2, %c0_3] : memref<16x128xf32, #tpu.memory_space<vmem>>, vector<16x128xf32>
    %cst_4 = arith.constant -8.700000e+01 : f32
    %8 = vector.broadcast %cst_4 : f32 to vector<16x128xf32>
    %9 = arith.maximumf %7, %8 : vector<16x128xf32>
    %cst_5 = arith.constant 0.000000e+00 : f32
    %10 = vector.broadcast %cst_5 : f32 to vector<16x128xf32>
    %11 = arith.subf %10, %9 : vector<16x128xf32>
    %12 = math.exp %11 : vector<16x128xf32>
    %cst_6 = arith.constant 1.000000e+00 : f32
    %13 = vector.broadcast %cst_6 : f32 to vector<16x128xf32>
    %14 = arith.addf %13, %12 : vector<16x128xf32>
    %15 = math.log %14 : vector<16x128xf32>
    %cst_7 = arith.constant 0.000000e+00 : f32
    %16 = vector.broadcast %cst_7 : f32 to vector<16x128xf32>
    %17 = arith.subf %16, %15 : vector<16x128xf32>
    %cst_8 = arith.constant -18.420681 : f32
    %18 = vector.broadcast %cst_8 : f32 to vector<16x128xf32>
    %19 = arith.maximumf %17, %18 : vector<16x128xf32>
    %cst_9 = arith.constant 0.000000e+00 : f32
    %20 = vector.broadcast %cst_9 : f32 to vector<16x128xf32>
    %21 = arith.subf %20, %9 : vector<16x128xf32>
    %22 = arith.subf %21, %15 : vector<16x128xf32>
    %cst_10 = arith.constant -18.420681 : f32
    %23 = vector.broadcast %cst_10 : f32 to vector<16x128xf32>
    %24 = arith.maximumf %22, %23 : vector<16x128xf32>
    %cst_11 = arith.constant 1.000000e+00 : f32
    %25 = vector.broadcast %cst_11 : f32 to vector<16x128xf32>
    %26 = arith.addf %25, %12 : vector<16x128xf32>
    %27 = tpu.reciprocal %26 {approx = true} : vector<16x128xf32> -> vector<16x128xf32>
    %28 = arith.mulf %26, %27 : vector<16x128xf32>
    %cst_12 = arith.constant 2.000000e+00 : f32
    %29 = vector.broadcast %cst_12 : f32 to vector<16x128xf32>
    %30 = arith.subf %29, %28 : vector<16x128xf32>
    %31 = arith.mulf %27, %30 : vector<16x128xf32>
    %32 = arith.mulf %26, %31 : vector<16x128xf32>
    %cst_13 = arith.constant 2.000000e+00 : f32
    %33 = vector.broadcast %cst_13 : f32 to vector<16x128xf32>
    %34 = arith.subf %33, %32 : vector<16x128xf32>
    %35 = arith.mulf %31, %34 : vector<16x128xf32>
    %cst_14 = arith.constant 1.000000e+00 : f32
    %36 = vector.broadcast %cst_14 : f32 to vector<16x128xf32>
    %37 = arith.subf %36, %35 : vector<16x128xf32>
    %38 = arith.mulf %37, %37 : vector<16x128xf32>
    %cst_15 = arith.constant 2.500000e-01 : f32
    %39 = vector.broadcast %cst_15 : f32 to vector<16x128xf32>
    %40 = arith.mulf %39, %38 : vector<16x128xf32>
    %cst_16 = arith.constant 0.000000e+00 : f32
    %41 = vector.broadcast %cst_16 : f32 to vector<16x128xf32>
    %42 = arith.subf %41, %19 : vector<16x128xf32>
    %43 = arith.mulf %40, %42 : vector<16x128xf32>
    %44 = arith.mulf %35, %35 : vector<16x128xf32>
    %cst_17 = arith.constant 7.500000e-01 : f32
    %45 = vector.broadcast %cst_17 : f32 to vector<16x128xf32>
    %46 = arith.mulf %45, %44 : vector<16x128xf32>
    %cst_18 = arith.constant 0.000000e+00 : f32
    %47 = vector.broadcast %cst_18 : f32 to vector<16x128xf32>
    %48 = arith.subf %47, %24 : vector<16x128xf32>
    %49 = arith.mulf %46, %48 : vector<16x128xf32>
    %50 = arith.subf %43, %49 : vector<16x128xf32>
    %cst_19 = arith.constant dense<0.000000e+00> : vector<16x128xf32>
    %51 = tpu.matmul %50, %6, %cst_19 {dimension_numbers = #tpu.dot_dimension_numbers<[1], [0], [0], [1], [0, 0, 1, 1], [], []>} : vector<16x128xf32>, vector<128x128xf32>, vector<16x128xf32> -> vector<16x128xf32>
    %c0_20 = arith.constant 0 : index
    %c0_21 = arith.constant 0 : index
    %52 = vector.load %arg2[%c0_20, %c0_21] : memref<16x4xf32, #tpu.memory_space<vmem>>, vector<16x4xf32>
    %c0_22 = arith.constant 0 : index
    %c0_23 = arith.constant 0 : index
    %53 = vector.load %arg4[%c0_22, %c0_23] : memref<8x128xf32, #tpu.memory_space<vmem>>, vector<8x128xf32>
    %54 = vector.extract_strided_slice %52 {offsets = [0, 0], sizes = [16, 1], strides = [1, 1]} : vector<16x4xf32> to vector<16x1xf32>
    %55 = vector.extract_strided_slice %52 {offsets = [0, 1], sizes = [16, 1], strides = [1, 1]} : vector<16x4xf32> to vector<16x1xf32>
    %56 = vector.extract_strided_slice %52 {offsets = [0, 2], sizes = [16, 1], strides = [1, 1]} : vector<16x4xf32> to vector<16x1xf32>
    %57 = vector.extract_strided_slice %52 {offsets = [0, 3], sizes = [16, 1], strides = [1, 1]} : vector<16x4xf32> to vector<16x1xf32>
    %58 = vector.extract_strided_slice %53 {offsets = [0, 0], sizes = [1, 128], strides = [1, 1]} : vector<8x128xf32> to vector<1x128xf32>
    %59 = vector.extract_strided_slice %53 {offsets = [1, 0], sizes = [1, 128], strides = [1, 1]} : vector<8x128xf32> to vector<1x128xf32>
    %60 = vector.extract_strided_slice %53 {offsets = [2, 0], sizes = [1, 128], strides = [1, 1]} : vector<8x128xf32> to vector<1x128xf32>
    %61 = vector.extract_strided_slice %53 {offsets = [3, 0], sizes = [1, 128], strides = [1, 1]} : vector<8x128xf32> to vector<1x128xf32>
    %62 = vector.broadcast %54 : vector<16x1xf32> to vector<16x128xf32>
    %63 = vector.broadcast %58 : vector<1x128xf32> to vector<16x128xf32>
    %64 = arith.subf %62, %63 : vector<16x128xf32>
    %65 = math.absf %64 : vector<16x128xf32>
    %66 = vector.broadcast %55 : vector<16x1xf32> to vector<16x128xf32>
    %67 = vector.broadcast %59 : vector<1x128xf32> to vector<16x128xf32>
    %68 = arith.subf %66, %67 : vector<16x128xf32>
    %69 = math.absf %68 : vector<16x128xf32>
    %70 = arith.addf %65, %69 : vector<16x128xf32>
    %71 = vector.broadcast %56 : vector<16x1xf32> to vector<16x128xf32>
    %72 = vector.broadcast %60 : vector<1x128xf32> to vector<16x128xf32>
    %73 = arith.subf %71, %72 : vector<16x128xf32>
    %74 = math.absf %73 : vector<16x128xf32>
    %75 = arith.addf %70, %74 : vector<16x128xf32>
    %76 = vector.broadcast %57 : vector<16x1xf32> to vector<16x128xf32>
    %77 = vector.broadcast %61 : vector<1x128xf32> to vector<16x128xf32>
    %78 = arith.subf %76, %77 : vector<16x128xf32>
    %79 = math.absf %78 : vector<16x128xf32>
    %80 = arith.addf %75, %79 : vector<16x128xf32>
    %81 = arith.addf %51, %80 : vector<16x128xf32>
    %c0_24 = arith.constant 0 : index
    %c0_25 = arith.constant 0 : index
    %82 = vector.load %arg5[%c0_24, %c0_25] : memref<16x128xf32, #tpu.memory_space<vmem>>, vector<16x128xf32>
    tpu.vector_store %arg5[%c0_24, %c0_25], %81 {strides = array<i32>} : memref<16x128xf32, #tpu.memory_space<vmem>>, vector<16x128xf32>,
    return
  }
  func.func @transform_0(%arg0: i32) -> (i32, i32) {
    %c0_i32 = arith.constant 0 : i32
    %c0_i32_0 = arith.constant 0 : i32
    return %arg0, %c0_i32 : i32, i32
  }
  func.func @transform_1(%arg0: i32) -> (i32, i32) {
    %c0_i32 = arith.constant 0 : i32
    %c0_i32_0 = arith.constant 0 : i32
    return %arg0, %c0_i32 : i32, i32
  }
  func.func @transform_2(%arg0: i32) -> (i32, i32) {
    %c0_i32 = arith.constant 0 : i32
    %c0_i32_0 = arith.constant 0 : i32
    %c0_i32_1 = arith.constant 0 : i32
    return %c0_i32, %c0_i32_0 : i32, i32
  }
  func.func @transform_3(%arg0: i32) -> (i32, i32) {
    %c0_i32 = arith.constant 0 : i32
    %c0_i32_0 = arith.constant 0 : i32
    %c0_i32_1 = arith.constant 0 : i32
    return %c0_i32, %c0_i32_0 : i32, i32
  }
  func.func @transform_4(%arg0: i32) -> (i32, i32) {
    %c0_i32 = arith.constant 0 : i32
    %c0_i32_0 = arith.constant 0 : i32
    return %arg0, %c0_i32 : i32, i32
  }
}

</mosaic_0001>

<llo_original>
// kernel: tpu_custom_call.1
$region0: #{tpu_custom_call.1}
  #allocation0 [shape = 'u32[]', space=smem, size = 0x4, offset = 0x4, fixed_abs, tag = 'smem constant byte address 0x4 - core index']
  #allocation1 [shape = 'u32[72,128]{1,0:T(1,128)}', space=vmem, size = 0x9000, scoped, tag = 'internal scratch']
  %s0 = inlined_call_operand.vmem [shape: f32[16,128], index: 0, kind: input, shape index: {}]
  %s1 = inlined_call_operand.vmem [shape: f32[16,4], index: 1, kind: input, shape index: {}]
  %s2 = inlined_call_operand.vmem [shape: s32[1,128], index: 2, kind: input, shape index: {}]
  %s3 = inlined_call_operand.hbm [shape: f32[8,128], index: 3, kind: input, shape index: {}]
  %s4 = inlined_call_operand.hbm [shape: f32[16,128], index: 4, kind: output, shape index: {}]
  %s5 = sld [smem:[#allocation0]]
  $region30: #{tpu_custom_call.1} parent=0
    _
  %s7 = ssub.s32 1, %s5
  %s8 = scalar_select 0, %s7, %s5
  $region1: #{tpu_custom_call.1} parent=0
    #allocation2 [shape = 'u8[4096]{0}', space=vmem, size = 0x1000, scoped, tag = 'input window, operand 3, single buffered']
    #allocation3 [shape = 's32[1]{0}', space=sflag, size = 0x4, scoped, tag = 'scoped memory for tpu_custom_call.1']
    #allocation4 [shape = 's32[1]{0}', space=sflag, size = 0x4, scoped, tag = 'scoped memory for tpu_custom_call.1']
    #allocation5 [shape = 'u8[8192]{0}', space=vmem, size = 0x2000, scoped, tag = 'output window, operand 0, single buffered']
    %9 = vsyncpa [#allocation3], 0
    %10 = vsyncpa [#allocation4], 0
    // Predicated region
    $region2: #{tpu_custom_call.1} parent=1 // pred_check
      _
    $region3: #{tpu_custom_call.1} parent=1 // pred_check_branch
      %12 = sbr.rel (0) target = $region5
    $region4: #{tpu_custom_call.1} parent=1 // pred_region
      _
    $region5: #{tpu_custom_call.1} parent=1 // pred_fallthru
      _
    // Predicated region
    $region6: #{tpu_custom_call.1} parent=1 // pred_check
      _
    $region7: #{tpu_custom_call.1} parent=1 // pred_check_branch
      %14 = sbr.rel (0) target = $region9
    $region8: #{tpu_custom_call.1} parent=1 // pred_region
      _
    $region9: #{tpu_custom_call.1} parent=1 // pred_fallthru
      _
    // Predicated region
    $region10: #{tpu_custom_call.1} parent=1 // pred_check
      _
    $region11: #{tpu_custom_call.1} parent=1 // pred_check_branch
      %16 = sbr.rel (0) target = $region13
    $region12: #{tpu_custom_call.1} parent=1 // pred_region
      _
    $region13: #{tpu_custom_call.1} parent=1 // pred_fallthru
      _
    // Predicated region
    $region14: #{tpu_custom_call.1} parent=1 // pred_check
      _
    $region15: #{tpu_custom_call.1} parent=1 // pred_check_branch
      %18 = sbr.rel (0) target = $region17
    $region16: #{tpu_custom_call.1} parent=1 // pred_region
      %20 = vsyncadd [#allocation3], 0
      %s22 = sshll.u32 %s3, 4
      %s23 = int_to_ptr.hbm [resolvable:$true] %s22
      %s24 = sshll.u32 [#allocation2], 4
      %s25 = int_to_ptr.vmem [resolvable:$true] %s24
      %27 = dma.hbm_to_vmem [thread:$0]  %s23, 128, %s25, [#allocation3]
    $region17: #{tpu_custom_call.1} parent=1 // pred_fallthru
      _
    // Predicated region
    $region18: #{tpu_custom_call.1} parent=1 // pred_check
      _
    $region19: #{tpu_custom_call.1} parent=1 // pred_check_branch
      %29 = sbr.rel (0) target = $region21
    $region20: #{tpu_custom_call.1} parent=1 // pred_region
      %31 = dma.done [#allocation3], 128
    $region21: #{tpu_custom_call.1} parent=1 // pred_fallthru
      _
    %v32 = vld [vmem:[%s2] sm:$0x1]
    %v33 = vlaneseq
    %v34 = vshrl.u32 %v33, 7
    %v35 = vadd.s32 %v34, 8
    %v36 = vadd.s32 %v34, 16
    %v37 = vadd.s32 %v34, 24
    %v38 = vadd.s32 %v34, 32
    %v39 = vadd.s32 %v34, 40
    %v40 = vadd.s32 %v34, 48
    %v41 = vadd.s32 %v34, 56
    %v42 = vadd.s32 %v34, 64
    %v43 = vadd.s32 %v34, 72
    %v44 = vadd.s32 %v34, 80
    %v45 = vadd.s32 %v34, 88
    %v46 = vadd.s32 %v34, 96
    %v47 = vadd.s32 %v34, 104
    %v48 = vadd.s32 %v34, 112
    %v49 = vadd.s32 %v34, 120
    %v50 = vperm.slane %v32, 0
    %vm51 = vcmp.eq.s32.totalorder %v34, %v50
    %vm52 = vcmp.eq.s32.totalorder %v35, %v50
    %vm53 = vcmp.eq.s32.totalorder %v36, %v50
    %vm54 = vcmp.eq.s32.totalorder %v37, %v50
    %vm55 = vcmp.eq.s32.totalorder %v38, %v50
    %vm56 = vcmp.eq.s32.totalorder %v39, %v50
    %vm57 = vcmp.eq.s32.totalorder %v40, %v50
    %vm58 = vcmp.eq.s32.totalorder %v41, %v50
    %vm59 = vcmp.eq.s32.totalorder %v42, %v50
    %vm60 = vcmp.eq.s32.totalorder %v43, %v50
    %vm61 = vcmp.eq.s32.totalorder %v44, %v50
    %vm62 = vcmp.eq.s32.totalorder %v45, %v50
    %vm63 = vcmp.eq.s32.totalorder %v46, %v50
    %vm64 = vcmp.eq.s32.totalorder %v47, %v50
    %vm65 = vcmp.eq.s32.totalorder %v48, %v50
    %vm66 = vcmp.eq.s32.totalorder %v49, %v50
    %v67 = vsel %vm51, 1.0, 0.0
    %v68 = vsel %vm52, 1.0, 0.0
    %v69 = vsel %vm53, 1.0, 0.0
    %v70 = vsel %vm54, 1.0, 0.0
    %v71 = vsel %vm55, 1.0, 0.0
    %v72 = vsel %vm56, 1.0, 0.0
    %v73 = vsel %vm57, 1.0, 0.0
    %v74 = vsel %vm58, 1.0, 0.0
    %v75 = vsel %vm59, 1.0, 0.0
    %v76 = vsel %vm60, 1.0, 0.0
    %v77 = vsel %vm61, 1.0, 0.0
    %v78 = vsel %vm62, 1.0, 0.0
    %v79 = vsel %vm63, 1.0, 0.0
    %v80 = vsel %vm64, 1.0, 0.0
    %v81 = vsel %vm65, 1.0, 0.0
    %v82 = vsel %vm66, 1.0, 0.0
    %v83 = vld [vmem:[%s0] sm:$0xff]
    %v84 = vld [vmem:[%s0 + $0x8] sm:$0xff]
    %v85 = vmax.f32 %v83, -87.0
    %v86 = vmax.f32 %v84, -87.0
    %v87 = vsub.f32 0.0, %v85
    %v88 = vsub.f32 0.0, %v86
    %v89 = vmul.f32 %v87, 1.442695
    %v90 = vpow.pop %v89
    %v91 = vmul.f32 %v88, 1.442695
    %v92 = vpow.pop %v91
    %v93 = vadd.f32 %v90, 1.0
    %v94 = vadd.f32 %v92, 1.0
    %v95 = vlog2.pop %v93
    %v96 = vmul.f32 %v95, 0.6931472
    %v97 = vlog2.pop %v94
    %v98 = vmul.f32 %v97, 0.6931472
    %v99 = vsub.f32 0.0, %v96
    %v100 = vsub.f32 0.0, %v98
    %v101 = vmax.f32 %v99, -18.420681
    %v102 = vmax.f32 %v100, -18.420681
    %v103 = vsub.f32 %v87, %v96
    %v104 = vsub.f32 %v88, %v98
    %v105 = vmax.f32 %v103, -18.420681
    %v106 = vmax.f32 %v104, -18.420681
    %v107 = vrcp.pop %v93
    %v108 = vrcp.pop %v94
    %v109 = vmul.f32 %v93, %v107
    %v110 = vmul.f32 %v94, %v108
    %v111 = vsub.f32 2.0, %v109
    %v112 = vsub.f32 2.0, %v110
    %v113 = vmul.f32 %v107, %v111
    %v114 = vmul.f32 %v108, %v112
    %v115 = vmul.f32 %v93, %v113
    %v116 = vmul.f32 %v94, %v114
    %v117 = vsub.f32 2.0, %v115
    %v118 = vsub.f32 2.0, %v116
    %v119 = vmul.f32 %v113, %v117
    %v120 = vmul.f32 %v114, %v118
    %v121 = vsub.f32 1.0, %v119
    %v122 = vsub.f32 1.0, %v120
    %v123 = vmul.f32 %v121, %v121
    %v124 = vmul.f32 %v122, %v122
    %v125 = vmul.f32 %v123, 0.25
    %v126 = vmul.f32 %v124, 0.25
    %v127 = vsub.f32 0.0, %v101
    %v128 = vsub.f32 0.0, %v102
    %v129 = vmul.f32 %v125, %v127
    %v130 = vmul.f32 %v126, %v128
    %v131 = vmul.f32 %v119, %v119
    %v132 = vmul.f32 %v120, %v120
    %v133 = vmul.f32 %v131, 0.75
    %v134 = vmul.f32 %v132, 0.75
    %v135 = vsub.f32 0.0, %v105
    %v136 = vsub.f32 0.0, %v106
    %v137 = vmul.f32 %v133, %v135
    %v138 = vmul.f32 %v134, %v136
    %v139 = vsub.f32 %v129, %v137
    %v140 = vsub.f32 %v130, %v138
    %v141 = vld [vmem:[%s1] sm:$0xff]
    %v142 = vld [vmem:[%s1 + $0x8] sm:$0xff]
    %v143 = vld [vmem:[#allocation2] sm:$0xff]
    %145 = vset.pattern.permute.xlu0 0
    %146 = vperm.xlu0 %145, %v141
    %v147 = vpop.permute.xlu0 %146
    %150 = vset.pattern.permute.xlu0 0
    %151 = vperm.xlu0 %150, %v142
    %v152 = vpop.permute.xlu0 %151
    %v154 = vperm.slane %v143, 0
    %v155 = vsub.f32 %v147, %v154
    %v156 = vsub.f32 %v152, %v154
    %v157 = vand.u32 2147483647, %v155
    %v158 = vand.u32 2147483647, %v156
    %159 = vset.pattern.permute.xlu0 1
    %160 = vperm.xlu0 %159, %v141
    %v161 = vpop.permute.xlu0 %160
    %163 = vset.pattern.permute.xlu0 1
    %164 = vperm.xlu0 %163, %v142
    %v165 = vpop.permute.xlu0 %164
    %v167 = vperm.slane %v143, 1
    %v168 = vsub.f32 %v161, %v167
    %v169 = vsub.f32 %v165, %v167
    %v170 = vand.u32 2147483647, %v168
    %v171 = vand.u32 2147483647, %v169
    %v172 = vadd.f32 %v157, %v170
    %v173 = vadd.f32 %v158, %v171
    %174 = vset.pattern.permute.xlu0 2
    %175 = vperm.xlu0 %174, %v141
    %v176 = vpop.permute.xlu0 %175
    %178 = vset.pattern.permute.xlu0 2
    %179 = vperm.xlu0 %178, %v142
    %v180 = vpop.permute.xlu0 %179
    %v182 = vperm.slane %v143, 2
    %v183 = vsub.f32 %v176, %v182
    %v184 = vsub.f32 %v180, %v182
    %v185 = vand.u32 2147483647, %v183
    %v186 = vand.u32 2147483647, %v184
    %v187 = vadd.f32 %v172, %v185
    %v188 = vadd.f32 %v173, %v186
    %189 = vset.pattern.permute.xlu0 3
    %190 = vperm.xlu0 %189, %v141
    %v191 = vpop.permute.xlu0 %190
    %193 = vset.pattern.permute.xlu0 3
    %194 = vperm.xlu0 %193, %v142
    %v195 = vpop.permute.xlu0 %194
    %v197 = vperm.slane %v143, 3
    %v198 = vsub.f32 %v191, %v197
    %v199 = vsub.f32 %v195, %v197
    %v200 = vand.u32 2147483647, %v198
    %v201 = vand.u32 2147483647, %v199
    %v202 = vadd.f32 %v187, %v200
    %v203 = vadd.f32 %v188, %v201
    %204 = vmatpush.msra.mxu0 %v82
    %205 = vmatpush.msra.mxu0 %v81
    %206 = vmatpush.msra.mxu0 %v80
    %207 = vmatpush.msra.mxu0 %v79
    %208 = vmatpush.msra.mxu0 %v78
    %209 = vmatpush.msra.mxu0 %v77
    %210 = vmatpush.msra.mxu0 %v76
    %211 = vmatpush.msra.mxu0 %v75
    %212 = vmatpush.msra.mxu0 %v74
    %213 = vmatpush.msra.mxu0 %v73
    %214 = vmatpush.msra.mxu0 %v72
    %215 = vmatpush.msra.mxu0 %v71
    %216 = vmatpush.msra.mxu0 %v70
    %217 = vmatpush.msra.mxu0 %v69
    %218 = vmatpush.msra.mxu0 %v68
    %219 = vmatpush.msra.mxu0 %v67
    %220 = vmatmul.f32.gmra.mxu0 %v139
    %v221 = vpop.f32.mrf.mxu0
    %v222 = vadd.f32 %v202, %v221
    %223 = vmatmul.f32.gmra.mxu0 %v140
    %v224 = vpop.f32.mrf.mxu0
    %v225 = vadd.f32 %v203, %v224
    %226 = vdwg.mxu0
    %227 = vst [vmem:[#allocation5] sm:$0xff] %v222
    %228 = vst [vmem:[#allocation5 + $0x8] sm:$0xff] %v225
    // Predicated region
    $region22: #{tpu_custom_call.1} parent=1 // pred_check
      _
    $region23: #{tpu_custom_call.1} parent=1 // pred_check_branch
      %230 = sbr.rel (0) target = $region25
    $region24: #{tpu_custom_call.1} parent=1 // pred_region
      %232 = vsyncadd [#allocation4], 0
      %s233 = sshll.u32 [#allocation5], 4
      %s234 = int_to_ptr.vmem [resolvable:$true] %s233
      %s235 = sshll.u32 %s4, 4
      %s236 = int_to_ptr.hbm [resolvable:$true] %s235
      %241 = dma.vmem_to_hbm [thread:$0]  %s234, 256, %s236, [#allocation4], 128, 128, 8
    $region25: #{tpu_custom_call.1} parent=1 // pred_fallthru
      _
    // Predicated region
    $region26: #{tpu_custom_call.1} parent=1 // pred_check
      _
    $region27: #{tpu_custom_call.1} parent=1 // pred_check_branch
      %243 = sbr.rel (0) target = $region29
    $region28: #{tpu_custom_call.1} parent=1 // pred_region
      %245 = dma.done [#allocation4], 256
    $region29: #{tpu_custom_call.1} parent=1 // pred_fallthru
      _
    %246 = vsyncpa [#allocation3], 1
    %247 = vsyncpa [#allocation4], 1

</llo_original>
